<compile_context>
chip_gen: v5e
topology: v5e:2x2
jax: 0.10.0
libtpu: 0.0.40
codegen_flags: <defaults>
</compile_context>

<pallas_src>
import jax
import jax.numpy as jnp
from jax import lax
from jax.experimental import pallas as pl
from jax.experimental.pallas import tpu as pltpu

HIDDEN = 256


def policy_kernel(x_ref, w1_ref, w2_ref, w3_ref,
                  b1_ref, b2_ref, b3_ref, scale_ref, bias_ref, o_ref):
    # x: [bt, n_obs] bf16 (batch-major)   w1: [256, n_obs]  w2: [256, 256]
    # w3: [n_act, 256]                    biases/scale/bias: [*, 1] f32
    x = x_ref[...]

    # Layer 1: contract over n_obs -> feature-major h1 [256, bt] (f32 acc).
    h1 = lax.dot_general(w1_ref[...], x, (((1,), (1,)), ((), ())),
                         preferred_element_type=jnp.float32)
    h1 = jnp.maximum(h1 + b1_ref[...], 0.0)

    # Layer 2: Linear + ReLU (bf16 MXU operands, f32 accumulate/elementwise).
    h2 = jnp.dot(w2_ref[...], h1.astype(jnp.bfloat16),
                 preferred_element_type=jnp.float32)
    h2 = jnp.maximum(h2 + b2_ref[...], 0.0)

    # Layer 3: Linear + Tanh, then affine rescale to the action range.
    a = jnp.dot(w3_ref[...], h2.astype(jnp.bfloat16),
                preferred_element_type=jnp.float32)
    a = jnp.tanh(a + b3_ref[...])
    o_ref[...] = (a * scale_ref[...] + bias_ref[...]).astype(o_ref.dtype)


def pack_params(params):
    """PyTorch-layout params -> kernel operands (bf16 weights, [*,1] f32 consts)."""
    w1, b1, w2, b2, w3, b3, action_scale, action_bias = params
    n_act = w3.shape[0]

    def col(v, n):  # robust to scalar action bounds
        v = jnp.asarray(v, jnp.float32).reshape(-1)
        return jnp.broadcast_to(v, (n,)).reshape(n, 1)

    return (w1.astype(jnp.bfloat16),                 # [256, n_obs]
            w2.astype(jnp.bfloat16),                 # [256, 256]
            w3.astype(jnp.bfloat16),                 # [n_act, 256]
            col(b1, HIDDEN), col(b2, HIDDEN),        # [256, 1] each
            col(b3, n_act), col(action_scale, n_act), col(action_bias, n_act))


def _num_tensorcores():
    """Best-effort TensorCore-per-chip count (2 only on v7x); default to 1."""
    try:
        kind = jax.devices()[0].device_kind.lower()
        return 2 if ("v7" in kind or "7x" in kind) else 1
    except Exception:
        return 1


def policy_forward(x, packed_params, *, batch_tile=1024, lane_major_out=False):
    """x: [B, n_obs] float. Returns [B, n_actions] float32
    (or the lane-dense [n_actions, B_pad] slab if lane_major_out=True)."""
    w1, w2, w3, b1, b2, b3, scale, bias = packed_params
    B, n_obs = x.shape
    n_actions = w3.shape[0]

    # Batch lives on the output lane axis -> tiles are 128-multiples.
    B_pad = pl.cdiv(B, 128) * 128
    bt = max(128, (min(batch_tile, B_pad) // 128) * 128)
    # Split a single grid step across cores only on 2-TC chips (v7x), and only
    # when each core still gets >= 256 lanes of work.  Never split on v5e/v6e.
    if _num_tensorcores() >= 2 and B_pad // bt < 2 and bt >= 512 and bt % 256 == 0:
        bt //= 2
    B_pad = pl.cdiv(B_pad, bt) * bt

    # Batch-major x, cast to bf16 at the boundary (halves B-scaled DMA bytes);
    # pad only the batch rows when needed (no-op for nicely sized batches).
    xb = x.astype(jnp.bfloat16)
    if B_pad != B:
        xb = jnp.pad(xb, ((0, B_pad - B), (0, 0)))

    grid = (B_pad // bt,)
    rep = lambda shape: pl.BlockSpec(shape, lambda i: (0, 0))  # replicated block

    cost = pl.CostEstimate(
        flops=2 * B_pad * (n_obs * HIDDEN + HIDDEN * HIDDEN + HIDDEN * n_actions),
        transcendentals=B_pad * n_actions,
        bytes_accessed=(xb.size * 2
                        + (w1.size + w2.size + w3.size) * 2
                        + (b1.size + b2.size + b3.size + scale.size + bias.size) * 4
                        + n_actions * B_pad * 4))

    outT = pl.pallas_call(
        policy_kernel,
        out_shape=jax.ShapeDtypeStruct((n_actions, B_pad), jnp.float32),
        grid_spec=pltpu.PrefetchScalarGridSpec(
            num_scalar_prefetch=0,
            grid=grid,
            in_specs=[
                pl.BlockSpec((bt, n_obs), lambda i: (i, 0)),   # x batch tile
                rep((HIDDEN, n_obs)),                          # w1 (bf16)
                rep((HIDDEN, HIDDEN)),                         # w2 (bf16)
                rep((n_actions, HIDDEN)),                      # w3 (bf16)
                rep((HIDDEN, 1)),                              # b1
                rep((HIDDEN, 1)),                              # b2
                rep((n_actions, 1)),                           # b3
                rep((n_actions, 1)),                           # action_scale
                rep((n_actions, 1)),                           # action_bias
            ],
            out_specs=pl.BlockSpec((n_actions, bt), lambda i: (0, i)),
        ),
        compiler_params=pltpu.CompilerParams(
            dimension_semantics=("parallel",)),
        cost_estimate=cost,
    )(xb, w1, w2, w3, b1, b2, b3, scale, bias)

    if lane_major_out:
        return outT                      # lane-dense [n_actions, B_pad] slab
    return outT[:, :B].T                 # PyTorch semantics: [B, n_actions]


def init_params(key, n_obs, n_actions, action_low, action_high):
    """Deterministic init mimicking PyTorch nn.Linear default; weights [out, in]."""
    ks = jax.random.split(key, 6)

    def linear(kw, kb, fan_in, fan_out):
        bound = 1.0 / jnp.sqrt(jnp.float32(fan_in))
        w = jax.random.uniform(kw, (fan_out, fan_in), jnp.float32, -bound, bound)
        b = jax.random.uniform(kb, (fan_out,), jnp.float32, -bound, bound)
        return w, b

    w1, b1 = linear(ks[0], ks[1], n_obs, HIDDEN)
    w2, b2 = linear(ks[2], ks[3], HIDDEN, HIDDEN)
    w3, b3 = linear(ks[4], ks[5], HIDDEN, n_actions)

    action_scale = ((action_high - action_low) / 2.0).astype(jnp.float32)
    action_bias = ((action_high + action_low) / 2.0).astype(jnp.float32)
    return (w1, b1, w2, b2, w3, b3, action_scale, action_bias)


def policy_ref(x, params):
    w1, b1, w2, b2, w3, b3, s, o = params
    h = jnp.maximum(x @ w1.T + b1, 0.0)
    h = jnp.maximum(h @ w2.T + b2, 0.0)
    return jnp.tanh(h @ w3.T + b3) * s + o


if __name__ == "__main__":
    key = jax.random.PRNGKey(0)
    k_param, k_x = jax.random.split(key)

    # Small, env-like shapes: 8 observations, 4 actions, batch of 2.
    batch, n_obs, n_actions = 2, 8, 4
    action_low = jnp.full((n_actions,), -2.0, jnp.float32)
    action_high = jnp.full((n_actions,), 2.0, jnp.float32)

    params = init_params(k_param, n_obs, n_actions, action_low, action_high)
    packed = pack_params(params)
    x = jax.random.normal(k_x, (batch, n_obs), jnp.float32)

    # jit the whole forward so the tiny pad/cast prologue and the final
    # slice/transpose epilogue share one dispatch with the pallas_call.
    fwd = jax.jit(lambda xx: policy_forward(xx, packed))
    out = jax.block_until_ready(fwd(x))

    # Sanity check against a pure-JAX f32 reference (looser tolerance: the
    # kernel uses bf16 matmul operands / bf16 x, elementwise math stays f32).
    ref = policy_ref(x, params)
    assert out.shape == (batch, n_actions)
    assert jnp.allclose(out, ref, atol=5e-2, rtol=5e-2), "mismatch vs reference"

    print("KERNEL_OK")
</pallas_src>

<mosaic_0001>
module attributes {stable_mosaic.version = 11 : i64} {
  func.func @policy_kernel(%arg0: i32, %arg1: memref<128x8xbf16, #tpu.memory_space<vmem>>, %arg2: memref<256x8xbf16, #tpu.memory_space<vmem>>, %arg3: memref<256x256xbf16, #tpu.memory_space<vmem>>, %arg4: memref<4x256xbf16, #tpu.memory_space<vmem>>, %arg5: memref<256x1xf32, #tpu.memory_space<vmem>>, %arg6: memref<256x1xf32, #tpu.memory_space<vmem>>, %arg7: memref<4x1xf32, #tpu.memory_space<vmem>>, %arg8: memref<4x1xf32, #tpu.memory_space<vmem>>, %arg9: memref<4x1xf32, #tpu.memory_space<vmem>>, %arg10: memref<4x128xf32, #tpu.memory_space<vmem>>) attributes {dimension_semantics = [#tpu.dimension_semantics<parallel>], iteration_bounds = array<i64: 1>, scalar_prefetch = 0 : i64, scratch_operands = 0 : i64, tpu.core_type = #tpu.core_type<tc>, window_params = [{transform_indices = @transform_0, window_bounds = array<i64: 128, 8>}, {pipeline_mode = #tpu.pipeline_mode<synchronous>, transform_indices = @transform_1, window_bounds = array<i64: 256, 8>}, {pipeline_mode = #tpu.pipeline_mode<synchronous>, transform_indices = @transform_2, window_bounds = array<i64: 256, 256>}, {pipeline_mode = #tpu.pipeline_mode<synchronous>, transform_indices = @transform_3, window_bounds = array<i64: 4, 256>}, {pipeline_mode = #tpu.pipeline_mode<synchronous>, transform_indices = @transform_4, window_bounds = array<i64: 256, 1>}, {pipeline_mode = #tpu.pipeline_mode<synchronous>, transform_indices = @transform_5, window_bounds = array<i64: 256, 1>}, {pipeline_mode = #tpu.pipeline_mode<synchronous>, transform_indices = @transform_6, window_bounds = array<i64: 4, 1>}, {pipeline_mode = #tpu.pipeline_mode<synchronous>, transform_indices = @transform_7, window_bounds = array<i64: 4, 1>}, {pipeline_mode = #tpu.pipeline_mode<synchronous>, transform_indices = @transform_8, window_bounds = array<i64: 4, 1>}, {transform_indices = @transform_9, window_bounds = array<i64: 4, 128>}]} {
    %c0 = arith.constant 0 : index
    %c0_0 = arith.constant 0 : index
    %0 = vector.load %arg1[%c0, %c0_0] : memref<128x8xbf16, #tpu.memory_space<vmem>>, vector<128x8xbf16>
    %c0_1 = arith.constant 0 : index
    %c0_2 = arith.constant 0 : index
    %1 = vector.load %arg2[%c0_1, %c0_2] : memref<256x8xbf16, #tpu.memory_space<vmem>>, vector<256x8xbf16>
    %cst = arith.constant dense<0.000000e+00> : vector<256x128xf32>
    %2 = tpu.matmul %1, %0, %cst {dimension_numbers = #tpu.dot_dimension_numbers<[1], [1], [0], [0], [0, 0, 1, 0], [], []>} : vector<256x8xbf16>, vector<128x8xbf16>, vector<256x128xf32> -> vector<256x128xf32>
    %c0_3 = arith.constant 0 : index
    %c0_4 = arith.constant 0 : index
    %3 = vector.load %arg5[%c0_3, %c0_4] : memref<256x1xf32, #tpu.memory_space<vmem>>, vector<256x1xf32>
    %4 = vector.broadcast %3 : vector<256x1xf32> to vector<256x128xf32>
    %5 = arith.addf %2, %4 : vector<256x128xf32>
    %cst_5 = arith.constant 0.000000e+00 : f32
    %6 = vector.broadcast %cst_5 : f32 to vector<256x128xf32>
    %7 = arith.maximumf %5, %6 : vector<256x128xf32>
    %c0_6 = arith.constant 0 : index
    %c0_7 = arith.constant 0 : index
    %8 = vector.load %arg3[%c0_6, %c0_7] : memref<256x256xbf16, #tpu.memory_space<vmem>>, vector<256x256xbf16>
    %9 = arith.truncf %7 : vector<256x128xf32> to vector<256x128xbf16>
    %cst_8 = arith.constant dense<0.000000e+00> : vector<256x128xf32>
    %10 = tpu.matmul %8, %9, %cst_8 {dimension_numbers = #tpu.dot_dimension_numbers<[1], [0], [0], [1], [0, 0, 1, 1], [], []>} : vector<256x256xbf16>, vector<256x128xbf16>, vector<256x128xf32> -> vector<256x128xf32>
    %c0_9 = arith.constant 0 : index
    %c0_10 = arith.constant 0 : index
    %11 = vector.load %arg6[%c0_9, %c0_10] : memref<256x1xf32, #tpu.memory_space<vmem>>, vector<256x1xf32>
    %12 = vector.broadcast %11 : vector<256x1xf32> to vector<256x128xf32>
    %13 = arith.addf %10, %12 : vector<256x128xf32>
    %cst_11 = arith.constant 0.000000e+00 : f32
    %14 = vector.broadcast %cst_11 : f32 to vector<256x128xf32>
    %15 = arith.maximumf %13, %14 : vector<256x128xf32>
    %c0_12 = arith.constant 0 : index
    %c0_13 = arith.constant 0 : index
    %16 = vector.load %arg4[%c0_12, %c0_13] : memref<4x256xbf16, #tpu.memory_space<vmem>>, vector<4x256xbf16>
    %17 = arith.truncf %15 : vector<256x128xf32> to vector<256x128xbf16>
    %cst_14 = arith.constant dense<0.000000e+00> : vector<4x128xf32>
    %18 = tpu.matmul %16, %17, %cst_14 {dimension_numbers = #tpu.dot_dimension_numbers<[1], [0], [0], [1], [0, 0, 1, 1], [], []>} : vector<4x256xbf16>, vector<256x128xbf16>, vector<4x128xf32> -> vector<4x128xf32>
    %c0_15 = arith.constant 0 : index
    %c0_16 = arith.constant 0 : index
    %19 = vector.load %arg7[%c0_15, %c0_16] : memref<4x1xf32, #tpu.memory_space<vmem>>, vector<4x1xf32>
    %20 = vector.broadcast %19 : vector<4x1xf32> to vector<4x128xf32>
    %21 = arith.addf %18, %20 : vector<4x128xf32>
    %22 = math.tanh %21 : vector<4x128xf32>
    %c0_17 = arith.constant 0 : index
    %c0_18 = arith.constant 0 : index
    %23 = vector.load %arg8[%c0_17, %c0_18] : memref<4x1xf32, #tpu.memory_space<vmem>>, vector<4x1xf32>
    %24 = vector.broadcast %23 : vector<4x1xf32> to vector<4x128xf32>
    %25 = arith.mulf %22, %24 : vector<4x128xf32>
    %c0_19 = arith.constant 0 : index
    %c0_20 = arith.constant 0 : index
    %26 = vector.load %arg9[%c0_19, %c0_20] : memref<4x1xf32, #tpu.memory_space<vmem>>, vector<4x1xf32>
    %27 = vector.broadcast %26 : vector<4x1xf32> to vector<4x128xf32>
    %28 = arith.addf %25, %27 : vector<4x128xf32>
    %c0_21 = arith.constant 0 : index
    %c0_22 = arith.constant 0 : index
    %29 = vector.load %arg10[%c0_21, %c0_22] : memref<4x128xf32, #tpu.memory_space<vmem>>, vector<4x128xf32>
    tpu.vector_store %arg10[%c0_21, %c0_22], %28 {strides = array<i32>} : memref<4x128xf32, #tpu.memory_space<vmem>>, vector<4x128xf32>,
    return
  }
  func.func @transform_0(%arg0: i32) -> (i32, i32) {
    %c0_i32 = arith.constant 0 : i32
    %c0_i32_0 = arith.constant 0 : i32
    return %arg0, %c0_i32 : i32, i32
  }
  func.func @transform_1(%arg0: i32) -> (i32, i32) {
    %c0_i32 = arith.constant 0 : i32
    %c0_i32_0 = arith.constant 0 : i32
    %c0_i32_1 = arith.constant 0 : i32
    return %c0_i32, %c0_i32_0 : i32, i32
  }
  func.func @transform_2(%arg0: i32) -> (i32, i32) {
    %c0_i32 = arith.constant 0 : i32
    %c0_i32_0 = arith.constant 0 : i32
    %c0_i32_1 = arith.constant 0 : i32
    return %c0_i32, %c0_i32_0 : i32, i32
  }
  func.func @transform_3(%arg0: i32) -> (i32, i32) {
    %c0_i32 = arith.constant 0 : i32
    %c0_i32_0 = arith.constant 0 : i32
    %c0_i32_1 = arith.constant 0 : i32
    return %c0_i32, %c0_i32_0 : i32, i32
  }
  func.func @transform_4(%arg0: i32) -> (i32, i32) {
    %c0_i32 = arith.constant 0 : i32
    %c0_i32_0 = arith.constant 0 : i32
    %c0_i32_1 = arith.constant 0 : i32
    return %c0_i32, %c0_i32_0 : i32, i32
  }
  func.func @transform_5(%arg0: i32) -> (i32, i32) {
    %c0_i32 = arith.constant 0 : i32
    %c0_i32_0 = arith.constant 0 : i32
    %c0_i32_1 = arith.constant 0 : i32
    return %c0_i32, %c0_i32_0 : i32, i32
  }
  func.func @transform_6(%arg0: i32) -> (i32, i32) {
    %c0_i32 = arith.constant 0 : i32
    %c0_i32_0 = arith.constant 0 : i32
    %c0_i32_1 = arith.constant 0 : i32
    return %c0_i32, %c0_i32_0 : i32, i32
  }
  func.func @transform_7(%arg0: i32) -> (i32, i32) {
    %c0_i32 = arith.constant 0 : i32
    %c0_i32_0 = arith.constant 0 : i32
    %c0_i32_1 = arith.constant 0 : i32
    return %c0_i32, %c0_i32_0 : i32, i32
  }
  func.func @transform_8(%arg0: i32) -> (i32, i32) {
    %c0_i32 = arith.constant 0 : i32
    %c0_i32_0 = arith.constant 0 : i32
    %c0_i32_1 = arith.constant 0 : i32
    return %c0_i32, %c0_i32_0 : i32, i32
  }
  func.func @transform_9(%arg0: i32) -> (i32, i32) {
    %c0_i32 = arith.constant 0 : i32
    %c0_i32_0 = arith.constant 0 : i32
    return %c0_i32, %arg0 : i32, i32
  }
}

</mosaic_0001>

<llo_original>
// kernel: _lambda_.1
$region0: #{_lambda_.1}
  #allocation0 [shape = 'u32[]', space=smem, size = 0x4, offset = 0x4, fixed_abs, tag = 'smem constant byte address 0x4 - core index']
  #allocation1 [shape = 'u32[72,128]{1,0:T(1,128)}', space=vmem, size = 0x9000, scoped, tag = 'internal scratch']
  %s0 = inlined_call_operand.vmem [shape: bf16[128,8], index: 0, kind: input, shape index: {}]
  %s1 = inlined_call_operand.hbm [shape: bf16[256,8], index: 1, kind: input, shape index: {}]
  %s2 = inlined_call_operand.hbm [shape: bf16[256,256], index: 2, kind: input, shape index: {}]
  %s3 = inlined_call_operand.vmem [shape: bf16[4,256], index: 3, kind: input, shape index: {}]
  %s4 = inlined_call_operand.hbm [shape: f32[256,1], index: 4, kind: input, shape index: {}]
  %s5 = inlined_call_operand.hbm [shape: f32[256,1], index: 5, kind: input, shape index: {}]
  %s6 = inlined_call_operand.vmem [shape: f32[4,1], index: 6, kind: input, shape index: {}]
  %s7 = inlined_call_operand.vmem [shape: f32[4,1], index: 7, kind: input, shape index: {}]
  %s8 = inlined_call_operand.vmem [shape: f32[4,1], index: 8, kind: input, shape index: {}]
  %s9 = inlined_call_operand.vmem [shape: f32[4,128], index: 9, kind: output, shape index: {}]
  %s10 = sld [smem:[#allocation0]]
  $region62: #{_lambda_.1} parent=0
    _
  %s12 = ssub.s32 1, %s10
  %s13 = scalar_select 0, %s12, %s10
  $region1: #{_lambda_.1} parent=0
    #allocation2 [shape = 'u8[65536]{0}', space=vmem, size = 0x10000, scoped, tag = 'input window, operand 1, single buffered']
    #allocation3 [shape = 's32[1]{0}', space=sflag, size = 0x4, scoped, tag = 'scoped memory for _lambda_.1']
    #allocation4 [shape = 'u8[131072]{0}', space=vmem, size = 0x20000, scoped, tag = 'input window, operand 2, single buffered']
    #allocation5 [shape = 's32[1]{0}', space=sflag, size = 0x4, scoped, tag = 'scoped memory for _lambda_.1']
    #allocation6 [shape = 'u8[131072]{0}', space=vmem, size = 0x20000, scoped, tag = 'input window, operand 4, single buffered']
    #allocation7 [shape = 'u8[131072]{0}', space=vmem, size = 0x20000, scoped, tag = 'input window, operand 5, single buffered']
    #allocation8 [shape = 's32[1]{0}', space=sflag, size = 0x4, scoped, tag = 'scoped memory for _lambda_.1']
    %14 = vsyncpa [#allocation3], 0
    %15 = vsyncpa [#allocation5], 0
    %16 = vsyncpa [#allocation8], 0
    // Predicated region
    $region2: #{_lambda_.1} parent=1 // pred_check
      _
    $region3: #{_lambda_.1} parent=1 // pred_check_branch
      %18 = sbr.rel (0) target = $region5
    $region4: #{_lambda_.1} parent=1 // pred_region
      _
    $region5: #{_lambda_.1} parent=1 // pred_fallthru
      _
    // Predicated region
    $region6: #{_lambda_.1} parent=1 // pred_check
      _
    $region7: #{_lambda_.1} parent=1 // pred_check_branch
      %20 = sbr.rel (0) target = $region9
    $region8: #{_lambda_.1} parent=1 // pred_region
      %22 = vsyncadd [#allocation3], 0
      %s23 = sshll.u32 %s1, 4
      %s24 = int_to_ptr.hbm [resolvable:$true] %s23
      %s25 = sshll.u32 [#allocation2], 4
      %s26 = int_to_ptr.vmem [resolvable:$true] %s25
      %31 = dma.hbm_to_vmem [thread:$0]  %s24, 2048, %s26, [#allocation3], 64, 64, 4
    $region9: #{_lambda_.1} parent=1 // pred_fallthru
      _
    // Predicated region
    $region10: #{_lambda_.1} parent=1 // pred_check
      _
    $region11: #{_lambda_.1} parent=1 // pred_check_branch
      %33 = sbr.rel (0) target = $region13
    $region12: #{_lambda_.1} parent=1 // pred_region
      %35 = vsyncadd [#allocation5], 0
      %s36 = sshll.u32 %s2, 4
      %s37 = int_to_ptr.hbm [resolvable:$true] %s36
      %s38 = sshll.u32 [#allocation4], 4
      %s39 = int_to_ptr.vmem [resolvable:$true] %s38
      %44 = dma.hbm_to_vmem [thread:$0]  %s37, 4096, %s39, [#allocation5], 128, 128, 8
    $region13: #{_lambda_.1} parent=1 // pred_fallthru
      _
    // Predicated region
    $region14: #{_lambda_.1} parent=1 // pred_check
      _
    $region15: #{_lambda_.1} parent=1 // pred_check_branch
      %46 = sbr.rel (0) target = $region17
    $region16: #{_lambda_.1} parent=1 // pred_region
      _
    $region17: #{_lambda_.1} parent=1 // pred_fallthru
      _
    // Predicated region
    $region18: #{_lambda_.1} parent=1 // pred_check
      _
    $region19: #{_lambda_.1} parent=1 // pred_check_branch
      %48 = sbr.rel (0) target = $region21
    $region20: #{_lambda_.1} parent=1 // pred_region
      %50 = vsyncadd [#allocation5], 0
      %s51 = sshll.u32 %s4, 4
      %s52 = int_to_ptr.hbm [resolvable:$true] %s51
      %s53 = sshll.u32 [#allocation6], 4
      %s54 = int_to_ptr.vmem [resolvable:$true] %s53
      %59 = dma.hbm_to_vmem [thread:$0]  %s52, 4096, %s54, [#allocation5], 128, 128, 8
    $region21: #{_lambda_.1} parent=1 // pred_fallthru
      _
    // Predicated region
    $region22: #{_lambda_.1} parent=1 // pred_check
      _
    $region23: #{_lambda_.1} parent=1 // pred_check_branch
      %61 = sbr.rel (0) target = $region25
    $region24: #{_lambda_.1} parent=1 // pred_region
      %63 = vsyncadd [#allocation8], 0
      %s64 = sshll.u32 %s5, 4
      %s65 = int_to_ptr.hbm [resolvable:$true] %s64
      %s66 = sshll.u32 [#allocation7], 4
      %s67 = int_to_ptr.vmem [resolvable:$true] %s66
      %72 = dma.hbm_to_vmem [thread:$0]  %s65, 4096, %s67, [#allocation8], 128, 128, 8
    $region25: #{_lambda_.1} parent=1 // pred_fallthru
      _
    // Predicated region
    $region26: #{_lambda_.1} parent=1 // pred_check
      _
    $region27: #{_lambda_.1} parent=1 // pred_check_branch
      %74 = sbr.rel (0) target = $region29
    $region28: #{_lambda_.1} parent=1 // pred_region
      _
    $region29: #{_lambda_.1} parent=1 // pred_fallthru
      _
    // Predicated region
    $region30: #{_lambda_.1} parent=1 // pred_check
      _
    $region31: #{_lambda_.1} parent=1 // pred_check_branch
      %76 = sbr.rel (0) target = $region33
    $region32: #{_lambda_.1} parent=1 // pred_region
      _
    $region33: #{_lambda_.1} parent=1 // pred_fallthru
      _
    // Predicated region
    $region34: #{_lambda_.1} parent=1 // pred_check
      _
    $region35: #{_lambda_.1} parent=1 // pred_check_branch
      %78 = sbr.rel (0) target = $region37
    $region36: #{_lambda_.1} parent=1 // pred_region
      _
    $region37: #{_lambda_.1} parent=1 // pred_fallthru
      _
    // Predicated region
    $region38: #{_lambda_.1} parent=1 // pred_check
      _
    $region39: #{_lambda_.1} parent=1 // pred_check_branch
      %80 = sbr.rel (0) target = $region41
    $region40: #{_lambda_.1} parent=1 // pred_region
      %82 = dma.done [#allocation3], 2048
    $region41: #{_lambda_.1} parent=1 // pred_fallthru
      _
    // Predicated region
    $region42: #{_lambda_.1} parent=1 // pred_check
      _
    $region43: #{_lambda_.1} parent=1 // pred_check_branch
      %84 = sbr.rel (0) target = $region45
    $region44: #{_lambda_.1} parent=1 // pred_region
      %86 = dma.done [#allocation5], 4096
    $region45: #{_lambda_.1} parent=1 // pred_fallthru
      _
    // Predicated region
    $region46: #{_lambda_.1} parent=1 // pred_check
      _
    $region47: #{_lambda_.1} parent=1 // pred_check_branch
      %88 = sbr.rel (0) target = $region49
    $region48: #{_lambda_.1} parent=1 // pred_region
      %90 = dma.done [#allocation5], 4096
    $region49: #{_lambda_.1} parent=1 // pred_fallthru
      _
    // Predicated region
    $region50: #{_lambda_.1} parent=1 // pred_check
      _
    $region51: #{_lambda_.1} parent=1 // pred_check_branch
      %92 = sbr.rel (0) target = $region53
    $region52: #{_lambda_.1} parent=1 // pred_region
      %94 = dma.done [#allocation8], 4096
    $region53: #{_lambda_.1} parent=1 // pred_fallthru
      _
    %v95 = vld [vmem:[%s0] sm:$0xf]
    %v96 = vld [vmem:[%s0 + $0x4] sm:$0xf]
    %v97 = vld [vmem:[%s0 + $0x8] sm:$0xf]
    %v98 = vld [vmem:[%s0 + $0xc] sm:$0xf]
    %v99 = vld [vmem:[%s0 + $0x10] sm:$0xf]
    %v100 = vld [vmem:[%s0 + $0x14] sm:$0xf]
    %v101 = vld [vmem:[%s0 + $0x18] sm:$0xf]
    %v102 = vld [vmem:[%s0 + $0x1c] sm:$0xf]
    %v103 = vld [vmem:[%s0 + $0x20] sm:$0xf]
    %v104 = vld [vmem:[%s0 + $0x24] sm:$0xf]
    %v105 = vld [vmem:[%s0 + $0x28] sm:$0xf]
    %v106 = vld [vmem:[%s0 + $0x2c] sm:$0xf]
    %v107 = vld [vmem:[%s0 + $0x30] sm:$0xf]
    %v108 = vld [vmem:[%s0 + $0x34] sm:$0xf]
    %v109 = vld [vmem:[%s0 + $0x38] sm:$0xf]
    %v110 = vld [vmem:[%s0 + $0x3c] sm:$0xf]
    %v111 = vld [vmem:[#allocation2] sm:$0xf]
    %v112 = vld [vmem:[#allocation2 + $0x4] sm:$0xf]
    %v113 = vld [vmem:[#allocation2 + $0x8] sm:$0xf]
    %v114 = vld [vmem:[#allocation2 + $0xc] sm:$0xf]
    %v115 = vld [vmem:[#allocation2 + $0x10] sm:$0xf]
    %v116 = vld [vmem:[#allocation2 + $0x14] sm:$0xf]
    %v117 = vld [vmem:[#allocation2 + $0x18] sm:$0xf]
    %v118 = vld [vmem:[#allocation2 + $0x1c] sm:$0xf]
    %v119 = vld [vmem:[#allocation2 + $0x20] sm:$0xf]
    %v120 = vld [vmem:[#allocation2 + $0x24] sm:$0xf]
    %v121 = vld [vmem:[#allocation2 + $0x28] sm:$0xf]
    %v122 = vld [vmem:[#allocation2 + $0x2c] sm:$0xf]
    %v123 = vld [vmem:[#allocation2 + $0x30] sm:$0xf]
    %v124 = vld [vmem:[#allocation2 + $0x34] sm:$0xf]
    %v125 = vld [vmem:[#allocation2 + $0x38] sm:$0xf]
    %v126 = vld [vmem:[#allocation2 + $0x3c] sm:$0xf]
    %v127 = vld [vmem:[#allocation2 + $0x40] sm:$0xf]
    %v128 = vld [vmem:[#allocation2 + $0x44] sm:$0xf]
    %v129 = vld [vmem:[#allocation2 + $0x48] sm:$0xf]
    %v130 = vld [vmem:[#allocation2 + $0x4c] sm:$0xf]
    %v131 = vld [vmem:[#allocation2 + $0x50] sm:$0xf]
    %v132 = vld [vmem:[#allocation2 + $0x54] sm:$0xf]
    %v133 = vld [vmem:[#allocation2 + $0x58] sm:$0xf]
    %v134 = vld [vmem:[#allocation2 + $0x5c] sm:$0xf]
    %v135 = vld [vmem:[#allocation2 + $0x60] sm:$0xf]
    %v136 = vld [vmem:[#allocation2 + $0x64] sm:$0xf]
    %v137 = vld [vmem:[#allocation2 + $0x68] sm:$0xf]
    %v138 = vld [vmem:[#allocation2 + $0x6c] sm:$0xf]
    %v139 = vld [vmem:[#allocation2 + $0x70] sm:$0xf]
    %v140 = vld [vmem:[#allocation2 + $0x74] sm:$0xf]
    %v141 = vld [vmem:[#allocation2 + $0x78] sm:$0xf]
    %v142 = vld [vmem:[#allocation2 + $0x7c] sm:$0xf]
    %v143 = vld [vmem:[#allocation6] sm:$0xff]
    %v144 = vld [vmem:[#allocation6 + $0x8] sm:$0xff]
    %v145 = vld [vmem:[#allocation6 + $0x10] sm:$0xff]
    %v146 = vld [vmem:[#allocation6 + $0x18] sm:$0xff]
    %v147 = vld [vmem:[#allocation6 + $0x20] sm:$0xff]
    %v148 = vld [vmem:[#allocation6 + $0x28] sm:$0xff]
    %v149 = vld [vmem:[#allocation6 + $0x30] sm:$0xff]
    %v150 = vld [vmem:[#allocation6 + $0x38] sm:$0xff]
    %v151 = vld [vmem:[#allocation6 + $0x40] sm:$0xff]
    %v152 = vld [vmem:[#allocation6 + $0x48] sm:$0xff]
    %v153 = vld [vmem:[#allocation6 + $0x50] sm:$0xff]
    %v154 = vld [vmem:[#allocation6 + $0x58] sm:$0xff]
    %v155 = vld [vmem:[#allocation6 + $0x60] sm:$0xff]
    %v156 = vld [vmem:[#allocation6 + $0x68] sm:$0xff]
    %v157 = vld [vmem:[#allocation6 + $0x70] sm:$0xff]
    %v158 = vld [vmem:[#allocation6 + $0x78] sm:$0xff]
    %v159 = vld [vmem:[#allocation6 + $0x80] sm:$0xff]
    %v160 = vld [vmem:[#allocation6 + $0x88] sm:$0xff]
    %v161 = vld [vmem:[#allocation6 + $0x90] sm:$0xff]
    %v162 = vld [vmem:[#allocation6 + $0x98] sm:$0xff]
    %v163 = vld [vmem:[#allocation6 + $0xa0] sm:$0xff]
    %v164 = vld [vmem:[#allocation6 + $0xa8] sm:$0xff]
    %v165 = vld [vmem:[#allocation6 + $0xb0] sm:$0xff]
    %v166 = vld [vmem:[#allocation6 + $0xb8] sm:$0xff]
    %v167 = vld [vmem:[#allocation6 + $0xc0] sm:$0xff]
    %v168 = vld [vmem:[#allocation6 + $0xc8] sm:$0xff]
    %v169 = vld [vmem:[#allocation6 + $0xd0] sm:$0xff]
    %v170 = vld [vmem:[#allocation6 + $0xd8] sm:$0xff]
    %v171 = vld [vmem:[#allocation6 + $0xe0] sm:$0xff]
    %v172 = vld [vmem:[#allocation6 + $0xe8] sm:$0xff]
    %v173 = vld [vmem:[#allocation6 + $0xf0] sm:$0xff]
    %v174 = vld [vmem:[#allocation6 + $0xf8] sm:$0xff]
    %176 = vset.pattern.permute.xlu0 0
    %177 = vperm.xlu0 %176, %v143
    %v178 = vpop.permute.xlu0 %177
    %181 = vset.pattern.permute.xlu0 0
    %182 = vperm.xlu0 %181, %v144
    %v183 = vpop.permute.xlu0 %182
    %186 = vset.pattern.permute.xlu0 0
    %187 = vperm.xlu0 %186, %v145
    %v188 = vpop.permute.xlu0 %187
    %191 = vset.pattern.permute.xlu0 0
    %192 = vperm.xlu0 %191, %v146
    %v193 = vpop.permute.xlu0 %192
    %196 = vset.pattern.permute.xlu0 0
    %197 = vperm.xlu0 %196, %v147
    %v198 = vpop.permute.xlu0 %197
    %201 = vset.pattern.permute.xlu0 0
    %202 = vperm.xlu0 %201, %v148
    %v203 = vpop.permute.xlu0 %202
    %206 = vset.pattern.permute.xlu0 0
    %207 = vperm.xlu0 %206, %v149
    %v208 = vpop.permute.xlu0 %207
    %211 = vset.pattern.permute.xlu0 0
    %212 = vperm.xlu0 %211, %v150
    %v213 = vpop.permute.xlu0 %212
    %216 = vset.pattern.permute.xlu0 0
    %217 = vperm.xlu0 %216, %v151
    %v218 = vpop.permute.xlu0 %217
    %221 = vset.pattern.permute.xlu0 0
    %222 = vperm.xlu0 %221, %v152
    %v223 = vpop.permute.xlu0 %222
    %226 = vset.pattern.permute.xlu0 0
    %227 = vperm.xlu0 %226, %v153
    %v228 = vpop.permute.xlu0 %227
    %231 = vset.pattern.permute.xlu0 0
    %232 = vperm.xlu0 %231, %v154
    %v233 = vpop.permute.xlu0 %232
    %236 = vset.pattern.permute.xlu0 0
    %237 = vperm.xlu0 %236, %v155
    %v238 = vpop.permute.xlu0 %237
    %241 = vset.pattern.permute.xlu0 0
    %242 = vperm.xlu0 %241, %v156
    %v243 = vpop.permute.xlu0 %242
    %246 = vset.pattern.permute.xlu0 0
    %247 = vperm.xlu0 %246, %v157
    %v248 = vpop.permute.xlu0 %247
    %251 = vset.pattern.permute.xlu0 0
    %252 = vperm.xlu0 %251, %v158
    %v253 = vpop.permute.xlu0 %252
    %256 = vset.pattern.permute.xlu0 0
    %257 = vperm.xlu0 %256, %v159
    %v258 = vpop.permute.xlu0 %257
    %261 = vset.pattern.permute.xlu0 0
    %262 = vperm.xlu0 %261, %v160
    %v263 = vpop.permute.xlu0 %262
    %266 = vset.pattern.permute.xlu0 0
    %267 = vperm.xlu0 %266, %v161
    %v268 = vpop.permute.xlu0 %267
    %271 = vset.pattern.permute.xlu0 0
    %272 = vperm.xlu0 %271, %v162
    %v273 = vpop.permute.xlu0 %272
    %276 = vset.pattern.permute.xlu0 0
    %277 = vperm.xlu0 %276, %v163
    %v278 = vpop.permute.xlu0 %277
    %281 = vset.pattern.permute.xlu0 0
    %282 = vperm.xlu0 %281, %v164
    %v283 = vpop.permute.xlu0 %282
    %286 = vset.pattern.permute.xlu0 0
    %287 = vperm.xlu0 %286, %v165
    %v288 = vpop.permute.xlu0 %287
    %291 = vset.pattern.permute.xlu0 0
    %292 = vperm.xlu0 %291, %v166
    %v293 = vpop.permute.xlu0 %292
    %296 = vset.pattern.permute.xlu0 0
    %297 = vperm.xlu0 %296, %v167
    %v298 = vpop.permute.xlu0 %297
    %301 = vset.pattern.permute.xlu0 0
    %302 = vperm.xlu0 %301, %v168
    %v303 = vpop.permute.xlu0 %302
    %306 = vset.pattern.permute.xlu0 0
    %307 = vperm.xlu0 %306, %v169
    %v308 = vpop.permute.xlu0 %307
    %311 = vset.pattern.permute.xlu0 0
    %312 = vperm.xlu0 %311, %v170
    %v313 = vpop.permute.xlu0 %312
    %316 = vset.pattern.permute.xlu0 0
    %317 = vperm.xlu0 %316, %v171
    %v318 = vpop.permute.xlu0 %317
    %321 = vset.pattern.permute.xlu0 0
    %322 = vperm.xlu0 %321, %v172
    %v323 = vpop.permute.xlu0 %322
    %326 = vset.pattern.permute.xlu0 0
    %327 = vperm.xlu0 %326, %v173
    %v328 = vpop.permute.xlu0 %327
    %331 = vset.pattern.permute.xlu0 0
    %332 = vperm.xlu0 %331, %v174
    %v333 = vpop.permute.xlu0 %332
    %v367 = vunpack.c.l.b16 %v111
    %v368 = vunpack.c.l.b16 %v112
    %v369 = vunpack.c.l.b16 %v113
    %v370 = vunpack.c.l.b16 %v114
    %v371 = vunpack.c.l.b16 %v115
    %v372 = vunpack.c.l.b16 %v116
    %v373 = vunpack.c.l.b16 %v117
    %v374 = vunpack.c.l.b16 %v118
    %v375 = vunpack.c.l.b16 %v119
    %v376 = vunpack.c.l.b16 %v120
    %v377 = vunpack.c.l.b16 %v121
    %v378 = vunpack.c.l.b16 %v122
    %v379 = vunpack.c.l.b16 %v123
    %v380 = vunpack.c.l.b16 %v124
    %v381 = vunpack.c.l.b16 %v125
    %v382 = vunpack.c.l.b16 %v126
    %v383 = vunpack.c.l.b16 %v127
    %v384 = vunpack.c.l.b16 %v128
    %v385 = vunpack.c.l.b16 %v129
    %v386 = vunpack.c.l.b16 %v130
    %v387 = vunpack.c.l.b16 %v131
    %v388 = vunpack.c.l.b16 %v132
    %v389 = vunpack.c.l.b16 %v133
    %v390 = vunpack.c.l.b16 %v134
    %v391 = vunpack.c.l.b16 %v135
    %v392 = vunpack.c.l.b16 %v136
    %v393 = vunpack.c.l.b16 %v137
    %v394 = vunpack.c.l.b16 %v138
    %v395 = vunpack.c.l.b16 %v139
    %v396 = vunpack.c.l.b16 %v140
    %v397 = vunpack.c.l.b16 %v141
    %v398 = vunpack.c.l.b16 %v142
    %v399 = vpack.c.b16 %v368, %v367
    %v400 = vpack.c.b16 %v370, %v369
    %v401 = vpack.c.b16 %v372, %v371
    %v402 = vpack.c.b16 %v374, %v373
    %v403 = vpack.c.b16 %v376, %v375
    %v404 = vpack.c.b16 %v378, %v377
    %v405 = vpack.c.b16 %v380, %v379
    %v406 = vpack.c.b16 %v382, %v381
    %v407 = vpack.c.b16 %v384, %v383
    %v408 = vpack.c.b16 %v386, %v385
    %v409 = vpack.c.b16 %v388, %v387
    %v410 = vpack.c.b16 %v390, %v389
    %v411 = vpack.c.b16 %v392, %v391
    %v412 = vpack.c.b16 %v394, %v393
    %v413 = vpack.c.b16 %v396, %v395
    %v414 = vpack.c.b16 %v398, %v397
    %v431 = vunpack.c.l.b16 %v95
    %v432 = vunpack.c.l.b16 %v96
    %v433 = vunpack.c.l.b16 %v97
    %v434 = vunpack.c.l.b16 %v98
    %v435 = vunpack.c.l.b16 %v99
    %v436 = vunpack.c.l.b16 %v100
    %v437 = vunpack.c.l.b16 %v101
    %v438 = vunpack.c.l.b16 %v102
    %v439 = vunpack.c.l.b16 %v103
    %v440 = vunpack.c.l.b16 %v104
    %v441 = vunpack.c.l.b16 %v105
    %v442 = vunpack.c.l.b16 %v106
    %v443 = vunpack.c.l.b16 %v107
    %v444 = vunpack.c.l.b16 %v108
    %v445 = vunpack.c.l.b16 %v109
    %v446 = vunpack.c.l.b16 %v110
    %v447 = vpack.c.b16 %v432, %v431
    %v448 = vpack.c.b16 %v434, %v433
    %v449 = vpack.c.b16 %v436, %v435
    %v450 = vpack.c.b16 %v438, %v437
    %v451 = vpack.c.b16 %v440, %v439
    %v452 = vpack.c.b16 %v442, %v441
    %v453 = vpack.c.b16 %v444, %v443
    %v454 = vpack.c.b16 %v446, %v445
    %vm455 = vcmask 64512
    %v457 = vsel %vm455, %v399, 0
    %v460 = vsel %vm455, %v400, 0
    %v463 = vsel %vm455, %v401, 0
    %v466 = vsel %vm455, %v402, 0
    %v469 = vsel %vm455, %v403, 0
    %v472 = vsel %vm455, %v404, 0
    %v475 = vsel %vm455, %v405, 0
    %v478 = vsel %vm455, %v406, 0
    %v481 = vsel %vm455, %v407, 0
    %v484 = vsel %vm455, %v408, 0
    %v487 = vsel %vm455, %v409, 0
    %v490 = vsel %vm455, %v410, 0
    %v493 = vsel %vm455, %v411, 0
    %v496 = vsel %vm455, %v412, 0
    %v499 = vsel %vm455, %v413, 0
    %v502 = vsel %vm455, %v414, 0
    %v505 = vsel %vm455, %v447, 0
    %v508 = vsel %vm455, %v448, 0
    %v511 = vsel %vm455, %v449, 0
    %v514 = vsel %vm455, %v450, 0
    %v517 = vsel %vm455, %v451, 0
    %v520 = vsel %vm455, %v452, 0
    %v523 = vsel %vm455, %v453, 0
    %v526 = vsel %vm455, %v454, 0
    %528 = vmatpush.bf16.xpose.msra.mxu0 %v526
    %529 = vmatpush.bf16.xpose.msra.mxu0 %v523
    %530 = vmatpush.bf16.xpose.msra.mxu0 %v520
    %531 = vmatpush.bf16.xpose.msra.mxu0 %v517
    %532 = vmatpush.bf16.xpose.msra.mxu0 %v514
    %533 = vmatpush.bf16.xpose.msra.mxu0 %v511
    %534 = vmatpush.bf16.xpose.msra.mxu0 %v508
    %535 = vmatpush.bf16.xpose.msra.mxu0 %v505
    %536 = vmatmul.bf16.gmra.mxu0 %v457
    %v537 = vpop.f32.mrf.mxu0
    %v538 = vadd.f32 %v178, %v537
    %v539 = vpop.f32.mrf.mxu0
    %v540 = vadd.f32 %v183, %v539
    %541 = vmatmul.bf16.gmra.mxu0 %v460
    %v542 = vpop.f32.mrf.mxu0
    %v543 = vadd.f32 %v188, %v542
    %v544 = vpop.f32.mrf.mxu0
    %v545 = vadd.f32 %v193, %v544
    %546 = vmatmul.bf16.gmra.mxu0 %v463
    %v547 = vpop.f32.mrf.mxu0
    %v548 = vadd.f32 %v198, %v547
    %v549 = vpop.f32.mrf.mxu0
    %v550 = vadd.f32 %v203, %v549
    %551 = vmatmul.bf16.gmra.mxu0 %v466
    %v552 = vpop.f32.mrf.mxu0
    %v553 = vadd.f32 %v208, %v552
    %v554 = vpop.f32.mrf.mxu0
    %v555 = vadd.f32 %v213, %v554
    %556 = vmatmul.bf16.gmra.mxu0 %v469
    %v557 = vpop.f32.mrf.mxu0
    %v558 = vadd.f32 %v218, %v557
    %v559 = vpop.f32.mrf.mxu0
    %v560 = vadd.f32 %v223, %v559
    %561 = vmatmul.bf16.gmra.mxu0 %v472
    %v562 = vpop.f32.mrf.mxu0
    %v563 = vadd.f32 %v228, %v562
    %v564 = vpop.f32.mrf.mxu0
    %v565 = vadd.f32 %v233, %v564
    %566 = vmatmul.bf16.gmra.mxu0 %v475
    %v567 = vpop.f32.mrf.mxu0
    %v568 = vadd.f32 %v238, %v567
    %v569 = vpop.f32.mrf.mxu0
    %v570 = vadd.f32 %v243, %v569
    %571 = vmatmul.bf16.gmra.mxu0 %v478
    %v572 = vpop.f32.mrf.mxu0
    %v573 = vadd.f32 %v248, %v572
    %v574 = vpop.f32.mrf.mxu0
    %v575 = vadd.f32 %v253, %v574
    %576 = vmatmul.bf16.gmra.mxu0 %v481
    %v577 = vpop.f32.mrf.mxu0
    %v578 = vadd.f32 %v258, %v577
    %v579 = vpop.f32.mrf.mxu0
    %v580 = vadd.f32 %v263, %v579
    %581 = vmatmul.bf16.gmra.mxu0 %v484
    %v582 = vpop.f32.mrf.mxu0
    %v583 = vadd.f32 %v268, %v582
    %v584 = vpop.f32.mrf.mxu0
    %v585 = vadd.f32 %v273, %v584
    %586 = vmatmul.bf16.gmra.mxu0 %v487
    %v587 = vpop.f32.mrf.mxu0
    %v588 = vadd.f32 %v278, %v587
    %v589 = vpop.f32.mrf.mxu0
    %v590 = vadd.f32 %v283, %v589
    %591 = vmatmul.bf16.gmra.mxu0 %v490
    %v592 = vpop.f32.mrf.mxu0
    %v593 = vadd.f32 %v288, %v592
    %v594 = vpop.f32.mrf.mxu0
    %v595 = vadd.f32 %v293, %v594
    %596 = vmatmul.bf16.gmra.mxu0 %v493
    %v597 = vpop.f32.mrf.mxu0
    %v598 = vadd.f32 %v298, %v597
    %v599 = vpop.f32.mrf.mxu0
    %v600 = vadd.f32 %v303, %v599
    %601 = vmatmul.bf16.gmra.mxu0 %v496
    %v602 = vpop.f32.mrf.mxu0
    %v603 = vadd.f32 %v308, %v602
    %v604 = vpop.f32.mrf.mxu0
    %v605 = vadd.f32 %v313, %v604
    %606 = vmatmul.bf16.gmra.mxu0 %v499
    %v607 = vpop.f32.mrf.mxu0
    %v608 = vadd.f32 %v318, %v607
    %v609 = vpop.f32.mrf.mxu0
    %v610 = vadd.f32 %v323, %v609
    %611 = vmatmul.bf16.gmra.mxu0 %v502
    %v612 = vpop.f32.mrf.mxu0
    %v613 = vadd.f32 %v328, %v612
    %v614 = vpop.f32.mrf.mxu0
    %v615 = vadd.f32 %v333, %v614
    %616 = vdwg.mxu0
    %v617 = vmax.f32 %v538, 0.0
    %v618 = vmax.f32 %v540, 0.0
    %v619 = vmax.f32 %v543, 0.0
    %v620 = vmax.f32 %v545, 0.0
    %v621 = vmax.f32 %v548, 0.0
    %v622 = vmax.f32 %v550, 0.0
    %v623 = vmax.f32 %v553, 0.0
    %v624 = vmax.f32 %v555, 0.0
    %v625 = vmax.f32 %v558, 0.0
    %v626 = vmax.f32 %v560, 0.0
    %v627 = vmax.f32 %v563, 0.0
    %v628 = vmax.f32 %v565, 0.0
    %v629 = vmax.f32 %v568, 0.0
    %v630 = vmax.f32 %v570, 0.0
    %v631 = vmax.f32 %v573, 0.0
    %v632 = vmax.f32 %v575, 0.0
    %v633 = vmax.f32 %v578, 0.0
    %v634 = vmax.f32 %v580, 0.0
    %v635 = vmax.f32 %v583, 0.0
    %v636 = vmax.f32 %v585, 0.0
    %v637 = vmax.f32 %v588, 0.0
    %v638 = vmax.f32 %v590, 0.0
    %v639 = vmax.f32 %v593, 0.0
    %v640 = vmax.f32 %v595, 0.0
    %v641 = vmax.f32 %v598, 0.0
    %v642 = vmax.f32 %v600, 0.0
    %v643 = vmax.f32 %v603, 0.0
    %v644 = vmax.f32 %v605, 0.0
    %v645 = vmax.f32 %v608, 0.0
    %v646 = vmax.f32 %v610, 0.0
    %v647 = vmax.f32 %v613, 0.0
    %v648 = vmax.f32 %v615, 0.0
    %v649 = vld [vmem:[#allocation4] sm:$0xff]
    %v650 = vld [vmem:[#allocation4 + $0x8] sm:$0xff]
    %v651 = vld [vmem:[#allocation4 + $0x10] sm:$0xff]
    %v652 = vld [vmem:[#allocation4 + $0x18] sm:$0xff]
    %v653 = vld [vmem:[#allocation4 + $0x20] sm:$0xff]
    %v654 = vld [vmem:[#allocation4 + $0x28] sm:$0xff]
    %v655 = vld [vmem:[#allocation4 + $0x30] sm:$0xff]
    %v656 = vld [vmem:[#allocation4 + $0x38] sm:$0xff]
    %v657 = vld [vmem:[#allocation4 + $0x40] sm:$0xff]
    %v658 = vld [vmem:[#allocation4 + $0x48] sm:$0xff]
    %v659 = vld [vmem:[#allocation4 + $0x50] sm:$0xff]
    %v660 = vld [vmem:[#allocation4 + $0x58] sm:$0xff]
    %v661 = vld [vmem:[#allocation4 + $0x60] sm:$0xff]
    %v662 = vld [vmem:[#allocation4 + $0x68] sm:$0xff]
    %v663 = vld [vmem:[#allocation4 + $0x70] sm:$0xff]
    %v664 = vld [vmem:[#allocation4 + $0x78] sm:$0xff]
    %v665 = vld [vmem:[#allocation4 + $0x80] sm:$0xff]
    %v666 = vld [vmem:[#allocation4 + $0x88] sm:$0xff]
    %v667 = vld [vmem:[#allocation4 + $0x90] sm:$0xff]
    %v668 = vld [vmem:[#allocation4 + $0x98] sm:$0xff]
    %v669 = vld [vmem:[#allocation4 + $0xa0] sm:$0xff]
    %v670 = vld [vmem:[#allocation4 + $0xa8] sm:$0xff]
    %v671 = vld [vmem:[#allocation4 + $0xb0] sm:$0xff]
    %v672 = vld [vmem:[#allocation4 + $0xb8] sm:$0xff]
    %v673 = vld [vmem:[#allocation4 + $0xc0] sm:$0xff]
    %v674 = vld [vmem:[#allocation4 + $0xc8] sm:$0xff]
    %v675 = vld [vmem:[#allocation4 + $0xd0] sm:$0xff]
    %v676 = vld [vmem:[#allocation4 + $0xd8] sm:$0xff]
    %v677 = vld [vmem:[#allocation4 + $0xe0] sm:$0xff]
    %v678 = vld [vmem:[#allocation4 + $0xe8] sm:$0xff]
    %v679 = vld [vmem:[#allocation4 + $0xf0] sm:$0xff]
    %v680 = vld [vmem:[#allocation4 + $0xf8] sm:$0xff]
    %v681 = vpack.c.bf16 %v618, %v617
    %v682 = vpack.c.bf16 %v620, %v619
    %v683 = vpack.c.bf16 %v622, %v621
    %v684 = vpack.c.bf16 %v624, %v623
    %v685 = vpack.c.bf16 %v626, %v625
    %v686 = vpack.c.bf16 %v628, %v627
    %v687 = vpack.c.bf16 %v630, %v629
    %v688 = vpack.c.bf16 %v632, %v631
    %v689 = vpack.c.bf16 %v634, %v633
    %v690 = vpack.c.bf16 %v636, %v635
    %v691 = vpack.c.bf16 %v638, %v637
    %v692 = vpack.c.bf16 %v640, %v639
    %v693 = vpack.c.bf16 %v642, %v641
    %v694 = vpack.c.bf16 %v644, %v643
    %v695 = vpack.c.bf16 %v646, %v645
    %v696 = vpack.c.bf16 %v648, %v647
    %v697 = vld [vmem:[#allocation7] sm:$0xff]
    %v698 = vld [vmem:[#allocation7 + $0x8] sm:$0xff]
    %v699 = vld [vmem:[#allocation7 + $0x10] sm:$0xff]
    %v700 = vld [vmem:[#allocation7 + $0x18] sm:$0xff]
    %v701 = vld [vmem:[#allocation7 + $0x20] sm:$0xff]
    %v702 = vld [vmem:[#allocation7 + $0x28] sm:$0xff]
    %v703 = vld [vmem:[#allocation7 + $0x30] sm:$0xff]
    %v704 = vld [vmem:[#allocation7 + $0x38] sm:$0xff]
    %v705 = vld [vmem:[#allocation7 + $0x40] sm:$0xff]
    %v706 = vld [vmem:[#allocation7 + $0x48] sm:$0xff]
    %v707 = vld [vmem:[#allocation7 + $0x50] sm:$0xff]
    %v708 = vld [vmem:[#allocation7 + $0x58] sm:$0xff]
    %v709 = vld [vmem:[#allocation7 + $0x60] sm:$0xff]
    %v710 = vld [vmem:[#allocation7 + $0x68] sm:$0xff]
    %v711 = vld [vmem:[#allocation7 + $0x70] sm:$0xff]
    %v712 = vld [vmem:[#allocation7 + $0x78] sm:$0xff]
    %v713 = vld [vmem:[#allocation7 + $0x80] sm:$0xff]
    %v714 = vld [vmem:[#allocation7 + $0x88] sm:$0xff]
    %v715 = vld [vmem:[#allocation7 + $0x90] sm:$0xff]
    %v716 = vld [vmem:[#allocation7 + $0x98] sm:$0xff]
    %v717 = vld [vmem:[#allocation7 + $0xa0] sm:$0xff]
    %v718 = vld [vmem:[#allocation7 + $0xa8] sm:$0xff]
    %v719 = vld [vmem:[#allocation7 + $0xb0] sm:$0xff]
    %v720 = vld [vmem:[#allocation7 + $0xb8] sm:$0xff]
    %v721 = vld [vmem:[#allocation7 + $0xc0] sm:$0xff]
    %v722 = vld [vmem:[#allocation7 + $0xc8] sm:$0xff]
    %v723 = vld [vmem:[#allocation7 + $0xd0] sm:$0xff]
    %v724 = vld [vmem:[#allocation7 + $0xd8] sm:$0xff]
    %v725 = vld [vmem:[#allocation7 + $0xe0] sm:$0xff]
    %v726 = vld [vmem:[#allocation7 + $0xe8] sm:$0xff]
    %v727 = vld [vmem:[#allocation7 + $0xf0] sm:$0xff]
    %v728 = vld [vmem:[#allocation7 + $0xf8] sm:$0xff]
    %730 = vset.pattern.permute.xlu0 0
    %731 = vperm.xlu0 %730, %v697
    %v732 = vpop.permute.xlu0 %731
    %735 = vset.pattern.permute.xlu0 0
    %736 = vperm.xlu0 %735, %v698
    %v737 = vpop.permute.xlu0 %736
    %740 = vset.pattern.permute.xlu0 0
    %741 = vperm.xlu0 %740, %v699
    %v742 = vpop.permute.xlu0 %741
    %745 = vset.pattern.permute.xlu0 0
    %746 = vperm.xlu0 %745, %v700
    %v747 = vpop.permute.xlu0 %746
    %750 = vset.pattern.permute.xlu0 0
    %751 = vperm.xlu0 %750, %v701
    %v752 = vpop.permute.xlu0 %751
    %755 = vset.pattern.permute.xlu0 0
    %756 = vperm.xlu0 %755, %v702
    %v757 = vpop.permute.xlu0 %756
    %760 = vset.pattern.permute.xlu0 0
    %761 = vperm.xlu0 %760, %v703
    %v762 = vpop.permute.xlu0 %761
    %765 = vset.pattern.permute.xlu0 0
    %766 = vperm.xlu0 %765, %v704
    %v767 = vpop.permute.xlu0 %766
    %770 = vset.pattern.permute.xlu0 0
    %771 = vperm.xlu0 %770, %v705
    %v772 = vpop.permute.xlu0 %771
    %775 = vset.pattern.permute.xlu0 0
    %776 = vperm.xlu0 %775, %v706
    %v777 = vpop.permute.xlu0 %776
    %780 = vset.pattern.permute.xlu0 0
    %781 = vperm.xlu0 %780, %v707
    %v782 = vpop.permute.xlu0 %781
    %785 = vset.pattern.permute.xlu0 0
    %786 = vperm.xlu0 %785, %v708
    %v787 = vpop.permute.xlu0 %786
    %790 = vset.pattern.permute.xlu0 0
    %791 = vperm.xlu0 %790, %v709
    %v792 = vpop.permute.xlu0 %791
    %795 = vset.pattern.permute.xlu0 0
    %796 = vperm.xlu0 %795, %v710
    %v797 = vpop.permute.xlu0 %796
    %800 = vset.pattern.permute.xlu0 0
    %801 = vperm.xlu0 %800, %v711
    %v802 = vpop.permute.xlu0 %801
    %805 = vset.pattern.permute.xlu0 0
    %806 = vperm.xlu0 %805, %v712
    %v807 = vpop.permute.xlu0 %806
    %810 = vset.pattern.permute.xlu0 0
    %811 = vperm.xlu0 %810, %v713
    %v812 = vpop.permute.xlu0 %811
    %815 = vset.pattern.permute.xlu0 0
    %816 = vperm.xlu0 %815, %v714
    %v817 = vpop.permute.xlu0 %816
    %820 = vset.pattern.permute.xlu0 0
    %821 = vperm.xlu0 %820, %v715
    %v822 = vpop.permute.xlu0 %821
    %825 = vset.pattern.permute.xlu0 0
    %826 = vperm.xlu0 %825, %v716
    %v827 = vpop.permute.xlu0 %826
    %830 = vset.pattern.permute.xlu0 0
    %831 = vperm.xlu0 %830, %v717
    %v832 = vpop.permute.xlu0 %831
    %835 = vset.pattern.permute.xlu0 0
    %836 = vperm.xlu0 %835, %v718
    %v837 = vpop.permute.xlu0 %836
    %840 = vset.pattern.permute.xlu0 0
    %841 = vperm.xlu0 %840, %v719
    %v842 = vpop.permute.xlu0 %841
    %845 = vset.pattern.permute.xlu0 0
    %846 = vperm.xlu0 %845, %v720
    %v847 = vpop.permute.xlu0 %846
    %850 = vset.pattern.permute.xlu0 0
    %851 = vperm.xlu0 %850, %v721
    %v852 = vpop.permute.xlu0 %851
    %855 = vset.pattern.permute.xlu0 0
    %856 = vperm.xlu0 %855, %v722
    %v857 = vpop.permute.xlu0 %856
    %860 = vset.pattern.permute.xlu0 0
    %861 = vperm.xlu0 %860, %v723
    %v862 = vpop.permute.xlu0 %861
    %865 = vset.pattern.permute.xlu0 0
    %866 = vperm.xlu0 %865, %v724
    %v867 = vpop.permute.xlu0 %866
    %870 = vset.pattern.permute.xlu0 0
    %871 = vperm.xlu0 %870, %v725
    %v872 = vpop.permute.xlu0 %871
    %875 = vset.pattern.permute.xlu0 0
    %876 = vperm.xlu0 %875, %v726
    %v877 = vpop.permute.xlu0 %876
    %880 = vset.pattern.permute.xlu0 0
    %881 = vperm.xlu0 %880, %v727
    %v882 = vpop.permute.xlu0 %881
    %885 = vset.pattern.permute.xlu0 0
    %886 = vperm.xlu0 %885, %v728
    %v887 = vpop.permute.xlu0 %886
    %v921 = vunpack.c.l.b16 %v649
    %v922 = vunpack.c.h.b16 %v649
    %v923 = vunpack.c.l.b16 %v650
    %v924 = vunpack.c.h.b16 %v650
    %v925 = vunpack.c.l.b16 %v651
    %v926 = vunpack.c.h.b16 %v651
    %v927 = vunpack.c.l.b16 %v652
    %v928 = vunpack.c.h.b16 %v652
    %v929 = vunpack.c.l.b16 %v653
    %v930 = vunpack.c.h.b16 %v653
    %v931 = vunpack.c.l.b16 %v654
    %v932 = vunpack.c.h.b16 %v654
    %v933 = vunpack.c.l.b16 %v655
    %v934 = vunpack.c.h.b16 %v655
    %v935 = vunpack.c.l.b16 %v656
    %v936 = vunpack.c.h.b16 %v656
    %v937 = vunpack.c.l.b16 %v657
    %v938 = vunpack.c.h.b16 %v657
    %v939 = vunpack.c.l.b16 %v658
    %v940 = vunpack.c.h.b16 %v658
    %v941 = vunpack.c.l.b16 %v659
    %v942 = vunpack.c.h.b16 %v659
    %v943 = vunpack.c.l.b16 %v660
    %v944 = vunpack.c.h.b16 %v660
    %v945 = vunpack.c.l.b16 %v661
    %v946 = vunpack.c.h.b16 %v661
    %v947 = vunpack.c.l.b16 %v662
    %v948 = vunpack.c.h.b16 %v662
    %v949 = vunpack.c.l.b16 %v663
    %v950 = vunpack.c.h.b16 %v663
    %v951 = vunpack.c.l.b16 %v664
    %v952 = vunpack.c.h.b16 %v664
    %v953 = vunpack.c.l.b16 %v665
    %v954 = vunpack.c.h.b16 %v665
    %v955 = vunpack.c.l.b16 %v666
    %v956 = vunpack.c.h.b16 %v666
    %v957 = vunpack.c.l.b16 %v667
    %v958 = vunpack.c.h.b16 %v667
    %v959 = vunpack.c.l.b16 %v668
    %v960 = vunpack.c.h.b16 %v668
    %v961 = vunpack.c.l.b16 %v669
    %v962 = vunpack.c.h.b16 %v669
    %v963 = vunpack.c.l.b16 %v670
    %v964 = vunpack.c.h.b16 %v670
    %v965 = vunpack.c.l.b16 %v671
    %v966 = vunpack.c.h.b16 %v671
    %v967 = vunpack.c.l.b16 %v672
    %v968 = vunpack.c.h.b16 %v672
    %v969 = vunpack.c.l.b16 %v673
    %v970 = vunpack.c.h.b16 %v673
    %v971 = vunpack.c.l.b16 %v674
    %v972 = vunpack.c.h.b16 %v674
    %v973 = vunpack.c.l.b16 %v675
    %v974 = vunpack.c.h.b16 %v675
    %v975 = vunpack.c.l.b16 %v676
    %v976 = vunpack.c.h.b16 %v676
    %v977 = vunpack.c.l.b16 %v677
    %v978 = vunpack.c.h.b16 %v677
    %v979 = vunpack.c.l.b16 %v678
    %v980 = vunpack.c.h.b16 %v678
    %v981 = vunpack.c.l.b16 %v679
    %v982 = vunpack.c.h.b16 %v679
    %v983 = vunpack.c.l.b16 %v680
    %v984 = vunpack.c.h.b16 %v680
    %v985 = vpack.c.b16 %v923, %v921
    %v986 = vpack.c.b16 %v924, %v922
    %v987 = vpack.c.b16 %v927, %v925
    %v988 = vpack.c.b16 %v928, %v926
    %v989 = vpack.c.b16 %v931, %v929
    %v990 = vpack.c.b16 %v932, %v930
    %v991 = vpack.c.b16 %v935, %v933
    %v992 = vpack.c.b16 %v936, %v934
    %v993 = vpack.c.b16 %v939, %v937
    %v994 = vpack.c.b16 %v940, %v938
    %v995 = vpack.c.b16 %v943, %v941
    %v996 = vpack.c.b16 %v944, %v942
    %v997 = vpack.c.b16 %v947, %v945
    %v998 = vpack.c.b16 %v948, %v946
    %v999 = vpack.c.b16 %v951, %v949
    %v1000 = vpack.c.b16 %v952, %v950
    %v1001 = vpack.c.b16 %v955, %v953
    %v1002 = vpack.c.b16 %v956, %v954
    %v1003 = vpack.c.b16 %v959, %v957
    %v1004 = vpack.c.b16 %v960, %v958
    %v1005 = vpack.c.b16 %v963, %v961
    %v1006 = vpack.c.b16 %v964, %v962
    %v1007 = vpack.c.b16 %v967, %v965
    %v1008 = vpack.c.b16 %v968, %v966
    %v1009 = vpack.c.b16 %v971, %v969
    %v1010 = vpack.c.b16 %v972, %v970
    %v1011 = vpack.c.b16 %v975, %v973
    %v1012 = vpack.c.b16 %v976, %v974
    %v1013 = vpack.c.b16 %v979, %v977
    %v1014 = vpack.c.b16 %v980, %v978
    %v1015 = vpack.c.b16 %v983, %v981
    %v1016 = vpack.c.b16 %v984, %v982
    %1049 = vmatpush.bf16.msra.mxu0 %v688
    %1050 = vmatpush.bf16.msra.mxu0 %v687
    %1051 = vmatpush.bf16.msra.mxu0 %v686
    %1052 = vmatpush.bf16.msra.mxu0 %v685
    %1053 = vmatpush.bf16.msra.mxu0 %v684
    %1054 = vmatpush.bf16.msra.mxu0 %v683
    %1055 = vmatpush.bf16.msra.mxu0 %v682
    %1056 = vmatpush.bf16.msra.mxu0 %v681
    %1057 = vmatmul.bf16.gmra.mxu0 %v985
    %v1058 = vpop.f32.mrf.mxu0
    %v1059 = vadd.f32 %v732, %v1058
    %v1060 = vpop.f32.mrf.mxu0
    %v1061 = vadd.f32 %v737, %v1060
    %1062 = vmatmul.bf16.gmra.mxu0 %v987
    %v1063 = vpop.f32.mrf.mxu0
    %v1064 = vadd.f32 %v742, %v1063
    %v1065 = vpop.f32.mrf.mxu0
    %v1066 = vadd.f32 %v747, %v1065
    %1067 = vmatmul.bf16.gmra.mxu0 %v989
    %v1068 = vpop.f32.mrf.mxu0
    %v1069 = vadd.f32 %v752, %v1068
    %v1070 = vpop.f32.mrf.mxu0
    %v1071 = vadd.f32 %v757, %v1070
    %1072 = vmatmul.bf16.gmra.mxu0 %v991
    %v1073 = vpop.f32.mrf.mxu0
    %v1074 = vadd.f32 %v762, %v1073
    %v1075 = vpop.f32.mrf.mxu0
    %v1076 = vadd.f32 %v767, %v1075
    %1077 = vmatmul.bf16.gmra.mxu0 %v993
    %v1078 = vpop.f32.mrf.mxu0
    %v1079 = vadd.f32 %v772, %v1078
    %v1080 = vpop.f32.mrf.mxu0
    %v1081 = vadd.f32 %v777, %v1080
    %1082 = vmatmul.bf16.gmra.mxu0 %v995
    %v1083 = vpop.f32.mrf.mxu0
    %v1084 = vadd.f32 %v782, %v1083
    %v1085 = vpop.f32.mrf.mxu0
    %v1086 = vadd.f32 %v787, %v1085
    %1087 = vmatmul.bf16.gmra.mxu0 %v997
    %v1088 = vpop.f32.mrf.mxu0
    %v1089 = vadd.f32 %v792, %v1088
    %v1090 = vpop.f32.mrf.mxu0
    %v1091 = vadd.f32 %v797, %v1090
    %1092 = vmatmul.bf16.gmra.mxu0 %v999
    %v1093 = vpop.f32.mrf.mxu0
    %v1094 = vadd.f32 %v802, %v1093
    %v1095 = vpop.f32.mrf.mxu0
    %v1096 = vadd.f32 %v807, %v1095
    %1097 = vmatmul.bf16.gmra.mxu0 %v1001
    %v1098 = vpop.f32.mrf.mxu0
    %v1099 = vadd.f32 %v812, %v1098
    %v1100 = vpop.f32.mrf.mxu0
    %v1101 = vadd.f32 %v817, %v1100
    %1102 = vmatmul.bf16.gmra.mxu0 %v1003
    %v1103 = vpop.f32.mrf.mxu0
    %v1104 = vadd.f32 %v822, %v1103
    %v1105 = vpop.f32.mrf.mxu0
    %v1106 = vadd.f32 %v827, %v1105
    %1107 = vmatmul.bf16.gmra.mxu0 %v1005
    %v1108 = vpop.f32.mrf.mxu0
    %v1109 = vadd.f32 %v832, %v1108
    %v1110 = vpop.f32.mrf.mxu0
    %v1111 = vadd.f32 %v837, %v1110
    %1112 = vmatmul.bf16.gmra.mxu0 %v1007
    %v1113 = vpop.f32.mrf.mxu0
    %v1114 = vadd.f32 %v842, %v1113
    %v1115 = vpop.f32.mrf.mxu0
    %v1116 = vadd.f32 %v847, %v1115
    %1117 = vmatmul.bf16.gmra.mxu0 %v1009
    %v1118 = vpop.f32.mrf.mxu0
    %v1119 = vadd.f32 %v852, %v1118
    %v1120 = vpop.f32.mrf.mxu0
    %v1121 = vadd.f32 %v857, %v1120
    %1122 = vmatmul.bf16.gmra.mxu0 %v1011
    %v1123 = vpop.f32.mrf.mxu0
    %v1124 = vadd.f32 %v862, %v1123
    %v1125 = vpop.f32.mrf.mxu0
    %v1126 = vadd.f32 %v867, %v1125
    %1127 = vmatmul.bf16.gmra.mxu0 %v1013
    %v1128 = vpop.f32.mrf.mxu0
    %v1129 = vadd.f32 %v872, %v1128
    %v1130 = vpop.f32.mrf.mxu0
    %v1131 = vadd.f32 %v877, %v1130
    %1132 = vmatmul.bf16.gmra.mxu0 %v1015
    %v1133 = vpop.f32.mrf.mxu0
    %v1134 = vadd.f32 %v882, %v1133
    %v1135 = vpop.f32.mrf.mxu0
    %v1136 = vadd.f32 %v887, %v1135
    %1137 = vdwg.mxu0
    %1138 = vmatpush.bf16.msra.mxu0 %v696
    %1139 = vmatpush.bf16.msra.mxu0 %v695
    %1140 = vmatpush.bf16.msra.mxu0 %v694
    %1141 = vmatpush.bf16.msra.mxu0 %v693
    %1142 = vmatpush.bf16.msra.mxu0 %v692
    %1143 = vmatpush.bf16.msra.mxu0 %v691
    %1144 = vmatpush.bf16.msra.mxu0 %v690
    %1145 = vmatpush.bf16.msra.mxu0 %v689
    %1146 = vmatmul.bf16.gmra.mxu0 %v986
    %v1147 = vpop.f32.mrf.mxu0
    %v1148 = vadd.f32 %v1059, %v1147
    %v1149 = vpop.f32.mrf.mxu0
    %v1150 = vadd.f32 %v1061, %v1149
    %1151 = vmatmul.bf16.gmra.mxu0 %v988
    %v1152 = vpop.f32.mrf.mxu0
    %v1153 = vadd.f32 %v1064, %v1152
    %v1154 = vpop.f32.mrf.mxu0
    %v1155 = vadd.f32 %v1066, %v1154
    %1156 = vmatmul.bf16.gmra.mxu0 %v990
    %v1157 = vpop.f32.mrf.mxu0
    %v1158 = vadd.f32 %v1069, %v1157
    %v1159 = vpop.f32.mrf.mxu0
    %v1160 = vadd.f32 %v1071, %v1159
    %1161 = vmatmul.bf16.gmra.mxu0 %v992
    %v1162 = vpop.f32.mrf.mxu0
    %v1163 = vadd.f32 %v1074, %v1162
    %v1164 = vpop.f32.mrf.mxu0
    %v1165 = vadd.f32 %v1076, %v1164
    %1166 = vmatmul.bf16.gmra.mxu0 %v994
    %v1167 = vpop.f32.mrf.mxu0
    %v1168 = vadd.f32 %v1079, %v1167
    %v1169 = vpop.f32.mrf.mxu0
    %v1170 = vadd.f32 %v1081, %v1169
    %1171 = vmatmul.bf16.gmra.mxu0 %v996
    %v1172 = vpop.f32.mrf.mxu0
    %v1173 = vadd.f32 %v1084, %v1172
    %v1174 = vpop.f32.mrf.mxu0
    %v1175 = vadd.f32 %v1086, %v1174
    %1176 = vmatmul.bf16.gmra.mxu0 %v998
    %v1177 = vpop.f32.mrf.mxu0
    %v1178 = vadd.f32 %v1089, %v1177
    %v1179 = vpop.f32.mrf.mxu0
    %v1180 = vadd.f32 %v1091, %v1179
    %1181 = vmatmul.bf16.gmra.mxu0 %v1000
    %v1182 = vpop.f32.mrf.mxu0
    %v1183 = vadd.f32 %v1094, %v1182
    %v1184 = vpop.f32.mrf.mxu0
    %v1185 = vadd.f32 %v1096, %v1184
    %1186 = vmatmul.bf16.gmra.mxu0 %v1002
    %v1187 = vpop.f32.mrf.mxu0
    %v1188 = vadd.f32 %v1099, %v1187
    %v1189 = vpop.f32.mrf.mxu0
    %v1190 = vadd.f32 %v1101, %v1189
    %1191 = vmatmul.bf16.gmra.mxu0 %v1004
    %v1192 = vpop.f32.mrf.mxu0
    %v1193 = vadd.f32 %v1104, %v1192
    %v1194 = vpop.f32.mrf.mxu0
    %v1195 = vadd.f32 %v1106, %v1194
    %1196 = vmatmul.bf16.gmra.mxu0 %v1006
    %v1197 = vpop.f32.mrf.mxu0
    %v1198 = vadd.f32 %v1109, %v1197
    %v1199 = vpop.f32.mrf.mxu0
    %v1200 = vadd.f32 %v1111, %v1199
    %1201 = vmatmul.bf16.gmra.mxu0 %v1008
    %v1202 = vpop.f32.mrf.mxu0
    %v1203 = vadd.f32 %v1114, %v1202
    %v1204 = vpop.f32.mrf.mxu0
    %v1205 = vadd.f32 %v1116, %v1204
    %1206 = vmatmul.bf16.gmra.mxu0 %v1010
    %v1207 = vpop.f32.mrf.mxu0
    %v1208 = vadd.f32 %v1119, %v1207
    %v1209 = vpop.f32.mrf.mxu0
    %v1210 = vadd.f32 %v1121, %v1209
    %1211 = vmatmul.bf16.gmra.mxu0 %v1012
    %v1212 = vpop.f32.mrf.mxu0
    %v1213 = vadd.f32 %v1124, %v1212
    %v1214 = vpop.f32.mrf.mxu0
    %v1215 = vadd.f32 %v1126, %v1214
    %1216 = vmatmul.bf16.gmra.mxu0 %v1014
    %v1217 = vpop.f32.mrf.mxu0
    %v1218 = vadd.f32 %v1129, %v1217
    %v1219 = vpop.f32.mrf.mxu0
    %v1220 = vadd.f32 %v1131, %v1219
    %1221 = vmatmul.bf16.gmra.mxu0 %v1016
    %v1222 = vpop.f32.mrf.mxu0
    %v1223 = vadd.f32 %v1134, %v1222
    %v1224 = vpop.f32.mrf.mxu0
    %v1225 = vadd.f32 %v1136, %v1224
    %1226 = vdwg.mxu0
    %v1227 = vmax.f32 %v1148, 0.0
    %v1228 = vmax.f32 %v1150, 0.0
    %v1229 = vmax.f32 %v1153, 0.0
    %v1230 = vmax.f32 %v1155, 0.0
    %v1231 = vmax.f32 %v1158, 0.0
    %v1232 = vmax.f32 %v1160, 0.0
    %v1233 = vmax.f32 %v1163, 0.0
    %v1234 = vmax.f32 %v1165, 0.0
    %v1235 = vmax.f32 %v1168, 0.0
    %v1236 = vmax.f32 %v1170, 0.0
    %v1237 = vmax.f32 %v1173, 0.0
    %v1238 = vmax.f32 %v1175, 0.0
    %v1239 = vmax.f32 %v1178, 0.0
    %v1240 = vmax.f32 %v1180, 0.0
    %v1241 = vmax.f32 %v1183, 0.0
    %v1242 = vmax.f32 %v1185, 0.0
    %v1243 = vmax.f32 %v1188, 0.0
    %v1244 = vmax.f32 %v1190, 0.0
    %v1245 = vmax.f32 %v1193, 0.0
    %v1246 = vmax.f32 %v1195, 0.0
    %v1247 = vmax.f32 %v1198, 0.0
    %v1248 = vmax.f32 %v1200, 0.0
    %v1249 = vmax.f32 %v1203, 0.0
    %v1250 = vmax.f32 %v1205, 0.0
    %v1251 = vmax.f32 %v1208, 0.0
    %v1252 = vmax.f32 %v1210, 0.0
    %v1253 = vmax.f32 %v1213, 0.0
    %v1254 = vmax.f32 %v1215, 0.0
    %v1255 = vmax.f32 %v1218, 0.0
    %v1256 = vmax.f32 %v1220, 0.0
    %v1257 = vmax.f32 %v1223, 0.0
    %v1258 = vmax.f32 %v1225, 0.0
    %v1259 = vld [vmem:[%s3] sm:$0xf]
    %v1260 = vpack.c.bf16 %v1228, %v1227
    %v1261 = vpack.c.bf16 %v1230, %v1229
    %v1262 = vpack.c.bf16 %v1232, %v1231
    %v1263 = vpack.c.bf16 %v1234, %v1233
    %v1264 = vpack.c.bf16 %v1236, %v1235
    %v1265 = vpack.c.bf16 %v1238, %v1237
    %v1266 = vpack.c.bf16 %v1240, %v1239
    %v1267 = vpack.c.bf16 %v1242, %v1241
    %v1268 = vpack.c.bf16 %v1244, %v1243
    %v1269 = vpack.c.bf16 %v1246, %v1245
    %v1270 = vpack.c.bf16 %v1248, %v1247
    %v1271 = vpack.c.bf16 %v1250, %v1249
    %v1272 = vpack.c.bf16 %v1252, %v1251
    %v1273 = vpack.c.bf16 %v1254, %v1253
    %v1274 = vpack.c.bf16 %v1256, %v1255
    %v1275 = vpack.c.bf16 %v1258, %v1257
    %v1276 = vld [vmem:[%s6] sm:$0xf]
    %1278 = vset.pattern.permute.xlu0 0
    %1279 = vperm.xlu0 %1278, %v1276
    %v1280 = vpop.permute.xlu0 %1279
    %1283 = vst [vmem:[#allocation1] ss:$4 sm:$0xff] %v1259
    %v1284 = vld.sshfl [vmem:[#allocation1] sm:$0xff pattern:$0x73625140]
    %v1285 = vld.sshfl [vmem:[#allocation1 + $0x8] sm:$0xff pattern:$0x73625140]
    %1288 = vmatpush.bf16.msra.mxu0 %v1267
    %1289 = vmatpush.bf16.msra.mxu0 %v1266
    %1290 = vmatpush.bf16.msra.mxu0 %v1265
    %1291 = vmatpush.bf16.msra.mxu0 %v1264
    %1292 = vmatpush.bf16.msra.mxu0 %v1263
    %1293 = vmatpush.bf16.msra.mxu0 %v1262
    %1294 = vmatpush.bf16.msra.mxu0 %v1261
    %1295 = vmatpush.bf16.msra.mxu0 %v1260
    %1296 = vmatmul.bf16.gmra.mxu0 %v1284
    %v1297 = vpop.f32.mrf.mxu0
    %v1298 = vadd.f32 %v1280, %v1297
    %v1299 = vpop.f32.mrf.mxu0
    %1300 = vdwg.mxu0
    %1301 = vmatpush.bf16.msra.mxu0 %v1275
    %1302 = vmatpush.bf16.msra.mxu0 %v1274
    %1303 = vmatpush.bf16.msra.mxu0 %v1273
    %1304 = vmatpush.bf16.msra.mxu0 %v1272
    %1305 = vmatpush.bf16.msra.mxu0 %v1271
    %1306 = vmatpush.bf16.msra.mxu0 %v1270
    %1307 = vmatpush.bf16.msra.mxu0 %v1269
    %1308 = vmatpush.bf16.msra.mxu0 %v1268
    %1309 = vmatmul.bf16.gmra.mxu0 %v1285
    %v1310 = vpop.f32.mrf.mxu0
    %v1311 = vadd.f32 %v1298, %v1310
    %v1312 = vpop.f32.mrf.mxu0
    %1313 = vdwg.mxu0
    %v1314 = vtanh.pop %v1311
    %v1315 = vld [vmem:[%s7] sm:$0xf]
    %1317 = vset.pattern.permute.xlu0 0
    %1318 = vperm.xlu0 %1317, %v1315
    %v1319 = vpop.permute.xlu0 %1318
    %v1321 = vmul.f32 %v1314, %v1319
    %v1322 = vld [vmem:[%s8] sm:$0xf]
    %1324 = vset.pattern.permute.xlu0 0
    %1325 = vperm.xlu0 %1324, %v1322
    %v1326 = vpop.permute.xlu0 %1325
    %v1328 = vadd.f32 %v1321, %v1326
    %1329 = vst [vmem:[%s9] sm:$0xf] %v1328
    // Predicated region
    $region54: #{_lambda_.1} parent=1 // pred_check
      _
    $region55: #{_lambda_.1} parent=1 // pred_check_branch
      %1331 = sbr.rel (0) target = $region57
    $region56: #{_lambda_.1} parent=1 // pred_region
      _
    $region57: #{_lambda_.1} parent=1 // pred_fallthru
      _
    // Predicated region
    $region58: #{_lambda_.1} parent=1 // pred_check
      _
    $region59: #{_lambda_.1} parent=1 // pred_check_branch
      %1333 = sbr.rel (0) target = $region61
    $region60: #{_lambda_.1} parent=1 // pred_region
      _
    $region61: #{_lambda_.1} parent=1 // pred_fallthru
      _
    %1334 = vsyncpa [#allocation3], 1
    %1335 = vsyncpa [#allocation5], 1
    %1336 = vsyncpa [#allocation8], 1

</llo_original>
